<compile_context>
chip_gen: v7x
topology: tpu7x:2x2x1
jax: 0.10.0
libtpu: 0.0.40
codegen_flags: <defaults>
</compile_context>

<pallas_src>
import jax
import jax.numpy as jnp
from jax.experimental import pallas as pl
from jax.experimental.pallas import tpu as pltpu


def _round_up(x, m):
    return ((x + m - 1) // m) * m


def relu(h):
    return jnp.maximum(h, 0.0)


def _make_single_k_kernel(activation):
    """Common case: whole reduction in one MXU dot, no accumulator round-trips."""
    def kernel(x_ref, w_ref, b_ref, o_ref):
        # x: (TM, K)  w: (K, TN)  b: (1, TN)  o: (TM, TN)
        h = jnp.dot(x_ref[...], w_ref[...], preferred_element_type=jnp.float32)
        h = h + b_ref[...]                       # bias broadcast over node axis
        if activation is not None:
            h = activation(h)
        o_ref[...] = h.astype(o_ref.dtype)
    return kernel


def _make_k_tiled_kernel(activation):
    """Wide layers: K is the trailing 'arbitrary' axis with an f32 accumulator."""
    def kernel(x_ref, w_ref, b_ref, o_ref, acc_ref):
        k = pl.program_id(2)
        part = jnp.dot(x_ref[...], w_ref[...], preferred_element_type=jnp.float32)

        @pl.when(k == 0)
        def _():
            acc_ref[...] = part                  # avoids zero-init store + reload

        @pl.when(k != 0)
        def _():
            acc_ref[...] += part

        @pl.when(k == pl.num_programs(2) - 1)
        def _():
            h = acc_ref[...] + b_ref[...]
            if activation is not None:
                h = activation(h)
            o_ref[...] = h.astype(o_ref.dtype)
    return kernel


def _tpu_vmem_capacity_bytes():
    try:
        info = pltpu.get_tpu_info()
        return int(getattr(info, "vmem_capacity_bytes", 64 << 20))
    except Exception:
        return 64 << 20                          # conservative (v7x per-TC) fallback


class NodeApply:
    """activation(x @ W.T + b): one-time parameter layout + jitted Pallas call."""

    def __init__(self, weight, bias, activation=relu, *,
                 compute_dtype=None, out_dtype=None, tk_max=1024):
        out_feats, in_feats = weight.shape
        assert bias.shape == (out_feats,)
        self.in_feats, self.out_feats = in_feats, out_feats
        self.activation = activation
        self.out_dtype = None if out_dtype is None else jnp.dtype(out_dtype)
        cdt = jnp.dtype(compute_dtype) if compute_dtype is not None else jnp.dtype(weight.dtype)
        self.cdt = cdt

        # ---- generation-aware budgets (v7x: 64 MiB/TC VMEM; v5e/v6e: 128 MiB) ----
        vmem_cap = _tpu_vmem_capacity_bytes()
        small_vmem = vmem_cap <= (64 << 20)
        self.vmem_cap_limit = (40 << 20) if small_vmem else (80 << 20)
        self.tm_default = 512 if small_vmem else 1024
        tn_max = 1024 if small_vmem else 2048

        # ---- out_feats tiling: lane-dense (multiple of 128) output tiles ----
        out_p = _round_up(out_feats, 128)
        if out_p > tn_max:
            tn = tn_max
            out_p = _round_up(out_feats, tn)
        else:
            tn = out_p
        self.out_p, self.tn = out_p, tn

        # ---- K tiling: keep the W tile resident only if the VMEM budget allows ----
        itemsize = cdt.itemsize

        def vmem_need(tk, k_tiled, tm):
            need = 2 * (tm * tk + tk * tn) * itemsize    # double-buffered x / w tiles
            need += 2 * tn * 4                           # bias
            need += 2 * tm * tn * 4                      # output tiles (f32 worst case)
            if k_tiled:
                need += tm * tn * 4                      # accumulator
            return need

        if in_feats <= tk_max and vmem_need(in_feats, False, self.tm_default) <= self.vmem_cap_limit:
            tk, in_p = in_feats, in_feats
        else:
            tk = 512                                     # multiple of 256 -> full MXU passes
            while vmem_need(tk, True, self.tm_default) > self.vmem_cap_limit and tk > 256:
                tk //= 2
            in_p = _round_up(in_feats, tk)
            if in_p == tk:                               # degenerate: single K tile after all
                tk = in_p
        self.tk, self.in_p = tk, in_p
        self.k_tiles = in_p // tk

        # ---- one-time parameter layout (transpose / cast / pad; reused across calls) ----
        w_t = jnp.asarray(weight).astype(cdt).T          # (in_feats, out_feats)
        w_t = jnp.pad(w_t, ((0, in_p - in_feats), (0, out_p - out_feats)))
        b2d = jnp.pad(jnp.asarray(bias).astype(jnp.float32),
                      (0, out_p - out_feats)).reshape(1, out_p)
        self.w_t = jax.device_put(w_t)
        self.b2d = jax.device_put(b2d)

        self._jitted = jax.jit(self._impl)               # traced once per x shape/dtype

    def __call__(self, x):
        # PyTorch module returns {'h': h}; the array is the payload.
        return self._jitted(x, self.w_t, self.b2d)

    def _impl(self, x, w_t, b2d):
        n, in_feats = x.shape
        assert in_feats == self.in_feats
        out_dtype = self.out_dtype if self.out_dtype is not None else x.dtype
        cdt = self.cdt

        x_c = x.astype(cdt)
        if self.in_p != in_feats:                        # K pad only on the K-tiled path
            x_c = jnp.pad(x_c, ((0, 0), (0, self.in_p - in_feats)))

        # Node tiling: large N -> full tiles with a partial final block (no HBM-sized
        # pad of x); tiny N -> one 16-aligned tile (negligible pad, exact layout).
        if n >= self.tm_default:
            tm, row_pad = self.tm_default, 0
        else:
            tm = max(_round_up(n, 16), 16)
            row_pad = tm - n
            if row_pad:
                x_c = jnp.pad(x_c, ((0, row_pad), (0, 0)))
        rows = n + row_pad
        n_tiles = pl.cdiv(rows, tm)
        out_tiles = self.out_p // self.tn

        itemsize = cdt.itemsize
        oi = jnp.dtype(out_dtype).itemsize
        need = (2 * (tm * self.tk + self.tk * self.tn) * itemsize
                + 2 * self.tn * 4 + 2 * tm * self.tn * oi)
        if self.k_tiles > 1:
            need += tm * self.tn * 4
        vmem_limit = int(min(max(2 * need, 16 << 20), self.vmem_cap_limit))

        # TODO(synk): transcendentals=0 assumes ReLU/None; pass a count for e.g. GELU.
        cost = pl.CostEstimate(
            flops=2 * rows * self.in_p * self.out_p,
            transcendentals=0,
            bytes_accessed=((rows * self.in_p + self.in_p * self.out_p) * itemsize
                            + self.out_p * 4 + rows * self.out_p * oi),
        )

        if self.k_tiles == 1:
            kernel = _make_single_k_kernel(self.activation)
            grid = (n_tiles, out_tiles)
            in_specs = [
                pl.BlockSpec((tm, self.tk), lambda i, j: (i, 0)),
                pl.BlockSpec((self.tk, self.tn), lambda i, j: (0, j)),
                pl.BlockSpec((1, self.tn), lambda i, j: (0, j)),
            ]
            out_specs = pl.BlockSpec((tm, self.tn), lambda i, j: (i, j))
            scratch = ()
            dims = ("parallel", "parallel")
        else:
            kernel = _make_k_tiled_kernel(self.activation)
            grid = (n_tiles, out_tiles, self.k_tiles)
            in_specs = [
                pl.BlockSpec((tm, self.tk), lambda i, j, k: (i, k)),
                pl.BlockSpec((self.tk, self.tn), lambda i, j, k: (k, j)),
                pl.BlockSpec((1, self.tn), lambda i, j, k: (0, j)),
            ]
            out_specs = pl.BlockSpec((tm, self.tn), lambda i, j, k: (i, j))
            scratch = (pltpu.VMEM((tm, self.tn), jnp.float32),)
            dims = ("parallel", "parallel", "arbitrary")

        out_padded = pl.pallas_call(
            kernel,
            out_shape=jax.ShapeDtypeStruct((rows, self.out_p), out_dtype),
            grid_spec=pltpu.PrefetchScalarGridSpec(
                num_scalar_prefetch=0,
                grid=grid,
                in_specs=in_specs,
                out_specs=out_specs,
                scratch_shapes=scratch,
            ),
            compiler_params=pltpu.CompilerParams(
                dimension_semantics=dims,
                vmem_limit_bytes=vmem_limit),
            cost_estimate=cost,
        )(x_c, w_t, b2d)

        if row_pad or self.out_p != self.out_feats:
            out_padded = out_padded[:n, :self.out_feats]
        return out_padded


def reference(x, weight, bias, activation=relu):
    h = x @ weight.T + bias
    return activation(h) if activation is not None else h


if __name__ == "__main__":
    key = jax.random.PRNGKey(0)

    # Small shapes consistent with the module: N nodes, in_feats -> out_feats.
    # Second case exercises partial node tiles and out_feats padding to 128 lanes.
    for (N, IN_FEATS, OUT_FEATS) in [(8, 32, 64), (300, 96, 200)]:
        kx, kw, kb, key = jax.random.split(key, 4)
        x = jax.random.normal(kx, (N, IN_FEATS), dtype=jnp.float32)

        # nn.Linear default init: uniform(-1/sqrt(in_feats), 1/sqrt(in_feats)).
        bound = 1.0 / jnp.sqrt(jnp.float32(IN_FEATS))
        weight = jax.random.uniform(kw, (OUT_FEATS, IN_FEATS), jnp.float32,
                                    minval=-bound, maxval=bound)
        bias = jax.random.uniform(kb, (OUT_FEATS,), jnp.float32,
                                  minval=-bound, maxval=bound)

        ref = reference(x, weight, bias)

        # f32 path (single-K fast kernel, no accumulator scratch)
        mod = NodeApply(weight, bias)
        out = jax.block_until_ready(mod(x))
        assert out.shape == (N, OUT_FEATS)
        assert jnp.allclose(out, ref, atol=1e-5, rtol=1e-5), "f32 mismatch vs reference"

        # bf16 MXU path (valid on v5e/v6e/v7x), f32 accumulation / epilogue
        mod_bf16 = NodeApply(weight, bias, compute_dtype=jnp.bfloat16)
        out_bf16 = jax.block_until_ready(mod_bf16(x))
        assert out_bf16.shape == (N, OUT_FEATS)
        assert jnp.allclose(out_bf16, ref, atol=5e-2, rtol=5e-2), "bf16 mismatch"

        # activation=None (module supports it)
        mod_lin = NodeApply(weight, bias, activation=None)
        out_lin = jax.block_until_ready(mod_lin(x))
        ref_lin = reference(x, weight, bias, activation=None)
        assert jnp.allclose(out_lin, ref_lin, atol=1e-5, rtol=1e-5), "linear mismatch"

    print("KERNEL_OK")
</pallas_src>

<mosaic_0001>
module attributes {stable_mosaic.version = 11 : i64} {
  func.func @kernel(%arg0: i32, %arg1: i32, %arg2: memref<16x32xf32, #tpu.memory_space<vmem>>, %arg3: memref<32x128xf32, #tpu.memory_space<vmem>>, %arg4: memref<1x128xf32, #tpu.memory_space<vmem>>, %arg5: memref<16x128xf32, #tpu.memory_space<vmem>>) attributes {dimension_semantics = [#tpu.dimension_semantics<parallel>, #tpu.dimension_semantics<parallel>], iteration_bounds = array<i64: 1, 1>, scalar_prefetch = 0 : i64, scratch_operands = 0 : i64, tpu.core_type = #tpu.core_type<tc>, window_params = [{transform_indices = @transform_0, window_bounds = array<i64: 16, 32>}, {transform_indices = @transform_1, window_bounds = array<i64: 32, 128>}, {transform_indices = @transform_2, window_bounds = array<i64: 1, 128>}, {transform_indices = @transform_3, window_bounds = array<i64: 16, 128>}]} {
    %c0 = arith.constant 0 : index
    %c0_0 = arith.constant 0 : index
    %0 = vector.load %arg2[%c0, %c0_0] : memref<16x32xf32, #tpu.memory_space<vmem>>, vector<16x32xf32>
    %c0_1 = arith.constant 0 : index
    %c0_2 = arith.constant 0 : index
    %1 = vector.load %arg3[%c0_1, %c0_2] : memref<32x128xf32, #tpu.memory_space<vmem>>, vector<32x128xf32>
    %cst = arith.constant dense<0.000000e+00> : vector<16x128xf32>
    %2 = tpu.matmul %0, %1, %cst {dimension_numbers = #tpu.dot_dimension_numbers<[1], [0], [0], [1], [0, 0, 1, 1], [], []>} : vector<16x32xf32>, vector<32x128xf32>, vector<16x128xf32> -> vector<16x128xf32>
    %c0_3 = arith.constant 0 : index
    %c0_4 = arith.constant 0 : index
    %3 = vector.load %arg4[%c0_3, %c0_4] : memref<1x128xf32, #tpu.memory_space<vmem>>, vector<1x128xf32>
    %4 = vector.broadcast %3 : vector<1x128xf32> to vector<16x128xf32>
    %5 = arith.addf %2, %4 : vector<16x128xf32>
    %cst_5 = arith.constant 0.000000e+00 : f32
    %6 = vector.broadcast %cst_5 : f32 to vector<16x128xf32>
    %7 = arith.maximumf %5, %6 : vector<16x128xf32>
    %c0_6 = arith.constant 0 : index
    %c0_7 = arith.constant 0 : index
    %8 = vector.load %arg5[%c0_6, %c0_7] : memref<16x128xf32, #tpu.memory_space<vmem>>, vector<16x128xf32>
    tpu.vector_store %arg5[%c0_6, %c0_7], %7 {strides = array<i32>} : memref<16x128xf32, #tpu.memory_space<vmem>>, vector<16x128xf32>,
    return
  }
  func.func @transform_0(%arg0: i32, %arg1: i32) -> (i32, i32) {
    %c0_i32 = arith.constant 0 : i32
    %c0_i32_0 = arith.constant 0 : i32
    return %arg0, %c0_i32 : i32, i32
  }
  func.func @transform_1(%arg0: i32, %arg1: i32) -> (i32, i32) {
    %c0_i32 = arith.constant 0 : i32
    %c0_i32_0 = arith.constant 0 : i32
    return %c0_i32, %arg1 : i32, i32
  }
  func.func @transform_2(%arg0: i32, %arg1: i32) -> (i32, i32) {
    %c0_i32 = arith.constant 0 : i32
    %c0_i32_0 = arith.constant 0 : i32
    return %c0_i32, %arg1 : i32, i32
  }
  func.func @transform_3(%arg0: i32, %arg1: i32) -> (i32, i32) {
    %c0_i32 = arith.constant 0 : i32
    return %arg0, %arg1 : i32, i32
  }
}

</mosaic_0001>

<llo_original>
// kernel: _impl.1
$region0: #{_impl.1}
  #allocation0 [shape = 'u32[]', space=smem, size = 0x4, offset = 0x4, fixed_abs, tag = 'smem constant byte address 0x4 - core index']
  #allocation1 [shape = 'u32[144,128]{1,0:T(1,128)}', space=vmem, size = 0x12000, scoped, tag = 'internal scratch']
  %s0 = inlined_call_operand.vmem [shape: f32[16,32], index: 0, kind: input, shape index: {}]
  %s1 = inlined_call_operand.hbm [shape: f32[32,128], index: 1, kind: input, shape index: {}]
  %s2 = inlined_call_operand.vmem [shape: f32[1,128], index: 2, kind: input, shape index: {}]
  %s3 = inlined_call_operand.vmem [shape: f32[16,128], index: 3, kind: output, shape index: {}]
  %s4 = sld [smem:[#allocation0]]
  $region26: #{_impl.1} parent=0
    _
  %s6 = ssub.s32 1, %s4
  %s7 = scalar_select 0, %s6, %s4
  $region1: #{_impl.1} parent=0
    #allocation2 [shape = 'u8[16384]{0}', space=vmem, size = 0x4000, scoped, tag = 'input window, operand 1, single buffered']
    #allocation3 [shape = 's32[1]{0}', space=sflag, size = 0x4, scoped, tag = 'scoped memory for _impl.1']
    %8 = vsyncpa [#allocation3], 0
    // Predicated region
    $region2: #{_impl.1} parent=1 // pred_check
      _
    $region3: #{_impl.1} parent=1 // pred_check_branch
      %10 = sbr.rel (0) target = $region5
    $region4: #{_impl.1} parent=1 // pred_region
      _
    $region5: #{_impl.1} parent=1 // pred_fallthru
      _
    // Predicated region
    $region6: #{_impl.1} parent=1 // pred_check
      _
    $region7: #{_impl.1} parent=1 // pred_check_branch
      %12 = sbr.rel (0) target = $region9
    $region8: #{_impl.1} parent=1 // pred_region
      %s14 = ssub.s32 512, 512
      %15 = vsyncadd [#allocation3], %s14
      %s16 = sshll.u32 [#allocation2], 4
      %s17 = int_to_ptr.vmem [resolvable:$true] %s16
      %22 = dma.hbm_to_vmem [thread:$0]  %s1, 512, %s17, [#allocation3], 128, 128, 8
    $region9: #{_impl.1} parent=1 // pred_fallthru
      _
    // Predicated region
    $region10: #{_impl.1} parent=1 // pred_check
      _
    $region11: #{_impl.1} parent=1 // pred_check_branch
      %24 = sbr.rel (0) target = $region13
    $region12: #{_impl.1} parent=1 // pred_region
      _
    $region13: #{_impl.1} parent=1 // pred_fallthru
      _
    // Predicated region
    $region14: #{_impl.1} parent=1 // pred_check
      _
    $region15: #{_impl.1} parent=1 // pred_check_branch
      %26 = sbr.rel (0) target = $region17
    $region16: #{_impl.1} parent=1 // pred_region
      %27 = dma.done [#allocation3], 512
    $region17: #{_impl.1} parent=1 // pred_fallthru
      _
    %v28 = vld [vmem:[%s0] sm:$0xff]
    %v29 = vld [vmem:[%s0 + $0x8] sm:$0xff]
    %v30 = vld [vmem:[#allocation2] sm:$0xff]
    %v31 = vld [vmem:[#allocation2 + $0x8] sm:$0xff]
    %v32 = vld [vmem:[#allocation2 + $0x10] sm:$0xff]
    %v33 = vld [vmem:[#allocation2 + $0x18] sm:$0xff]
    %v34 = vld [vmem:[%s2] sm:$0x1]
    %v36 = vlaneseq
    %v37 = vshrl.u32 %v36, 7
    %v38 = vsub.s32 0, %v37
    %v39 = vrot.slane %v34, %v38
    %vm41 = vcmask 261120
    %v43 = vsel %vm41, %v28, 0
    %v46 = vsel %vm41, %v29, 0
    %48 = vmatprep.subr.mxu0 0.0
    %49 = vmatpush1.msra.mxu0 %v30
    %50 = vmatprep.subr.mxu0 0.0
    %51 = vmatpush1.msra.mxu0 %v31
    %52 = vmatprep.subr.mxu0 0.0
    %53 = vmatpush1.msra.mxu0 %v32
    %54 = vmatprep.subr.mxu0 0.0
    %55 = vmatpush1.msra.mxu0 %v33
    %56 = vmatprep.subr.mxu0 0.0
    %57 = vmatpush1.msra.mxu0 0.0
    %58 = vmatprep.subr.mxu0 0.0
    %59 = vmatpush1.msra.mxu0 0.0
    %60 = vmatprep.subr.mxu0 0.0
    %61 = vmatpush1.msra.mxu0 0.0
    %62 = vmatprep.subr.mxu0 0.0
    %63 = vmatpush1.msra.mxu0 0.0
    %64 = vmatprep.subr.mxu0 0.0
    %65 = vmatpush1.msra.mxu0 0.0
    %66 = vmatprep.subr.mxu0 0.0
    %67 = vmatpush1.msra.mxu0 0.0
    %68 = vmatprep.subr.mxu0 0.0
    %69 = vmatpush1.msra.mxu0 0.0
    %70 = vmatprep.subr.mxu0 0.0
    %71 = vmatpush1.msra.mxu0 0.0
    %72 = vmatprep.subr.mxu0 0.0
    %73 = vmatpush1.msra.mxu0 0.0
    %74 = vmatprep.subr.mxu0 0.0
    %75 = vmatpush1.msra.mxu0 0.0
    %76 = vmatprep.subr.mxu0 0.0
    %77 = vmatpush1.msra.mxu0 0.0
    %78 = vmatprep.subr.mxu0 0.0
    %79 = vmatpush1.msra.mxu0 0.0
    %80 = vmatprep.subr.mxu0 0.0
    %81 = vmatpush1.msra.mxu0 0.0
    %82 = vmatprep.subr.mxu0 0.0
    %83 = vmatpush1.msra.mxu0 0.0
    %84 = vmatprep.subr.mxu0 0.0
    %85 = vmatpush1.msra.mxu0 0.0
    %86 = vmatprep.subr.mxu0 0.0
    %87 = vmatpush1.msra.mxu0 0.0
    %88 = vmatprep.subr.mxu0 0.0
    %89 = vmatpush1.msra.mxu0 0.0
    %90 = vmatprep.subr.mxu0 0.0
    %91 = vmatpush1.msra.mxu0 0.0
    %92 = vmatprep.subr.mxu0 0.0
    %93 = vmatpush1.msra.mxu0 0.0
    %94 = vmatprep.subr.mxu0 0.0
    %95 = vmatpush1.msra.mxu0 0.0
    %96 = vmatprep.subr.mxu0 0.0
    %97 = vmatpush1.msra.mxu0 0.0
    %98 = vmatprep.subr.mxu0 0.0
    %99 = vmatpush1.msra.mxu0 0.0
    %100 = vmatprep.subr.mxu0 0.0
    %101 = vmatpush1.msra.mxu0 0.0
    %102 = vmatprep.subr.mxu0 0.0
    %103 = vmatpush1.msra.mxu0 0.0
    %104 = vmatprep.subr.mxu0 0.0
    %105 = vmatpush1.msra.mxu0 0.0
    %106 = vmatprep.subr.mxu0 0.0
    %107 = vmatpush1.msra.mxu0 0.0
    %108 = vmatprep.subr.mxu0 0.0
    %109 = vmatpush1.msra.mxu0 0.0
    %110 = vmatprep.subr.mxu0 0.0
    %111 = vmatpush1.msra.mxu0 0.0
    %112 = vmatprep.mubr.f32.mxu0 0.0
    %113 = vmatmul.mubr.f32.gmra.mrb[0].mxu0 %v43
    %v114 = vpop.f32.mrb[0].mxu0
    %v115 = vadd.f32 %v39, %v114
    %v116 = vpop.f32.mrb[0].mxu0
    %117 = vmatprep.mubr.f32.mxu0 0.0
    %118 = vmatmul.mubr.f32.gmra.mrb[0].mxu0 %v46
    %v119 = vpop.f32.mrb[0].mxu0
    %v120 = vadd.f32 %v39, %v119
    %v121 = vpop.f32.mrb[0].mxu0
    %122 = vdwg.mxu0
    %v123 = vmax.f32 %v115, 0.0
    %v124 = vmax.f32 %v120, 0.0
    %125 = vst [vmem:[%s3] sm:$0xff] %v123
    %126 = vst [vmem:[%s3 + $0x8] sm:$0xff] %v124
    // Predicated region
    $region18: #{_impl.1} parent=1 // pred_check
      _
    $region19: #{_impl.1} parent=1 // pred_check_branch
      %128 = sbr.rel (0) target = $region21
    $region20: #{_impl.1} parent=1 // pred_region
      _
    $region21: #{_impl.1} parent=1 // pred_fallthru
      _
    // Predicated region
    $region22: #{_impl.1} parent=1 // pred_check
      _
    $region23: #{_impl.1} parent=1 // pred_check_branch
      %130 = sbr.rel (0) target = $region25
    $region24: #{_impl.1} parent=1 // pred_region
      _
    $region25: #{_impl.1} parent=1 // pred_fallthru
      _
    %131 = vsyncpa [#allocation3], 1

</llo_original>
